<compile_context>
chip_gen: v7x
topology: tpu7x:2x2x1
jax: 0.10.0
libtpu: 0.0.40
codegen_flags: <defaults>
</compile_context>

<pallas_src>
import jax
import jax.numpy as jnp
from jax.experimental import pallas as pl
from jax.experimental.pallas import tpu as pltpu


def _round_up(x, m):
    return ((x + m - 1) // m) * m


def gcn_kernel(alpha_ref, x_ref, w_ref, o_ref):
    # Fused: linear (no bias) + PReLU.
    # Cast the f32 emb tile to bf16 in vregs (cheap VPU op, hidden under MXU);
    # accumulation stays f32 on the MXU.
    x = x_ref[...].astype(jnp.bfloat16)
    e = jnp.dot(x, w_ref[...], preferred_element_type=jnp.float32)
    a = alpha_ref[0]                      # scalar PReLU slope from SMEM
    o_ref[...] = jnp.where(e > 0, e, a * e).astype(o_ref.dtype)


def gcn_forward(emb, weight, alpha, *, tm=512):
    """GCN forward: PReLU(emb @ weight.T).

    emb:    [N, in_ft]  float32 (read as-is; cast to bf16 inside the kernel)
    weight: [out_ft, in_ft] float32 (PyTorch nn.Linear layout, bias=False)
    alpha:  [1] float32 (PReLU slope)
    returns [N, out_ft] float32
    """
    N, in_ft = emb.shape
    out_ft = weight.shape[0]

    # ---- layout plumbing (wrapper-side, no extra pass over emb) -------------
    # Lane-dense output: pad out_ft up to a multiple of 128 -> unmasked stores.
    out_ft_p = _round_up(out_ft, 128)

    # Generation-aware VMEM budget (leave ~25% headroom for compiler scratch).
    try:
        vmem_cap = int(pltpu.get_tpu_info().vmem_capacity_bytes)
    except Exception:
        vmem_cap = 64 * 1024 * 1024       # conservative fallback (v7x-sized)
    budget = (vmem_cap * 3) // 4          # ~48 MiB on v7x, ~96 MiB on v5e/v6e

    # Row tile: small N -> full (8-aligned) extent; large N -> multiples of 256
    # (keeps the 256-deep MXU fully fed and amortizes per-step overhead).
    if N <= 256:
        tm = _round_up(N, 8)
    else:
        tm = min(_round_up(tm, 256), _round_up(N, 256))

    # Column tile over the padded out_ft (multiples of 128, lane-dense).
    tn = out_ft_p

    def _vmem_bytes(t_m, t_n):
        return (2 * t_m * in_ft * 4        # double-buffered f32 emb tile
                + 2 * in_ft * t_n * 2      # double-buffered bf16 W^T block
                + 2 * t_m * t_n * 4)       # double-buffered f32 out tile

    # Fit the budget: shrink the W^T column block first (keeps row tiles big),
    # only then shrink tm.
    while tn > 128 and _vmem_bytes(tm, tn) > budget:
        tn = _round_up(tn // 2, 128)
    while tm > 256 and _vmem_bytes(tm, tn) > budget:
        tm = _round_up(tm // 2, 256)
    while tm > 8 and _vmem_bytes(tm, tn) > budget:
        tm = _round_up(max(8, tm // 2), 8)

    grid_m = pl.cdiv(N, tm)
    grid_n = pl.cdiv(out_ft_p, tn)

    # Weight: transpose to [in_ft, out_ft], pad columns, cast to bf16.
    # (Small, one-time; emb itself is NOT copied.)
    w_t = jnp.pad(weight.T, ((0, 0), (0, out_ft_p - out_ft))).astype(jnp.bfloat16)

    cost = pl.CostEstimate(
        flops=2 * N * in_ft * out_ft_p,
        transcendentals=0,
        bytes_accessed=N * in_ft * 4 + in_ft * out_ft_p * 2 + N * out_ft_p * 4,
    )

    out_p = pl.pallas_call(
        gcn_kernel,
        out_shape=jax.ShapeDtypeStruct((N, out_ft_p), jnp.float32),
        grid_spec=pltpu.PrefetchScalarGridSpec(
            num_scalar_prefetch=1,                 # alpha -> SMEM, prefetched
            grid=(grid_m, grid_n),
            in_specs=[
                # f32 emb row tile (constant across the j axis -> fetched once per i).
                pl.BlockSpec((tm, in_ft), lambda i, j, a_ref: (i, 0)),
                # bf16 W^T column block.
                pl.BlockSpec((in_ft, tn), lambda i, j, a_ref: (0, j)),
            ],
            out_specs=pl.BlockSpec((tm, tn), lambda i, j, a_ref: (i, j)),
        ),
        compiler_params=pltpu.CompilerParams(
            dimension_semantics=("parallel", "parallel"),
            vmem_limit_bytes=budget,
        ),
        cost_estimate=cost,
    )(alpha, emb, w_t)

    # Slice off the lane padding (rows are exact: no wrapper row pad).
    return out_p[:, :out_ft]


if __name__ == "__main__":
    key = jax.random.PRNGKey(0)
    k_x, k_w = jax.random.split(key)

    N, in_ft, out_ft = 16, 32, 64

    # Input embeddings.
    emb = jax.random.normal(k_x, (N, in_ft), dtype=jnp.float32)

    # Deterministic Xavier-uniform init for the Linear weight [out_ft, in_ft],
    # matching torch.nn.init.xavier_uniform_.
    bound = (6.0 / (in_ft + out_ft)) ** 0.5
    weight = jax.random.uniform(
        k_w, (out_ft, in_ft), dtype=jnp.float32, minval=-bound, maxval=bound
    )

    # PReLU slope (nn.PReLU() default: single parameter, init 0.25).
    alpha = jnp.array([0.25], dtype=jnp.float32)

    out = gcn_forward(emb, weight, alpha)
    out = jax.block_until_ready(out)

    # Sanity check against a pure-JAX f32 reference (bf16 operands -> loosened tol).
    e_ref = emb @ weight.T
    ref = jnp.where(e_ref > 0, e_ref, 0.25 * e_ref)
    assert out.shape == (N, out_ft)
    assert jnp.allclose(out, ref, atol=2e-2, rtol=2e-2), float(
        jnp.max(jnp.abs(out - ref))
    )

    print("KERNEL_OK")
</pallas_src>

<mosaic_0001>
module attributes {stable_mosaic.version = 11 : i64} {
  func.func @gcn_kernel(%arg0: i32, %arg1: i32, %arg2: memref<1xf32, #tpu.memory_space<smem>>, %arg3: memref<16x32xf32, #tpu.memory_space<vmem>>, %arg4: memref<32x128xbf16, #tpu.memory_space<vmem>>, %arg5: memref<16x128xf32, #tpu.memory_space<vmem>>) attributes {dimension_semantics = [#tpu.dimension_semantics<parallel>, #tpu.dimension_semantics<parallel>], iteration_bounds = array<i64: 1, 1>, scalar_prefetch = 1 : i64, scratch_operands = 0 : i64, tpu.core_type = #tpu.core_type<tc>, window_params = [{transform_indices = @transform_0, window_bounds = array<i64: 16, 32>}, {transform_indices = @transform_1, window_bounds = array<i64: 32, 128>}, {transform_indices = @transform_2, window_bounds = array<i64: 16, 128>}]} {
    %c0 = arith.constant 0 : index
    %c0_0 = arith.constant 0 : index
    %0 = vector.load %arg3[%c0, %c0_0] : memref<16x32xf32, #tpu.memory_space<vmem>>, vector<16x32xf32>
    %1 = arith.truncf %0 : vector<16x32xf32> to vector<16x32xbf16>
    %c0_1 = arith.constant 0 : index
    %c0_2 = arith.constant 0 : index
    %2 = vector.load %arg4[%c0_1, %c0_2] : memref<32x128xbf16, #tpu.memory_space<vmem>>, vector<32x128xbf16>
    %cst = arith.constant dense<0.000000e+00> : vector<16x128xf32>
    %3 = tpu.matmul %1, %2, %cst {dimension_numbers = #tpu.dot_dimension_numbers<[1], [0], [0], [1], [0, 0, 1, 1], [], []>} : vector<16x32xbf16>, vector<32x128xbf16>, vector<16x128xf32> -> vector<16x128xf32>
    %c0_3 = arith.constant 0 : index
    %4 = memref.load %arg2[%c0_3] : memref<1xf32, #tpu.memory_space<smem>>
    %cst_4 = arith.constant 0.000000e+00 : f32
    %5 = vector.broadcast %cst_4 : f32 to vector<16x128xf32>
    %6 = arith.cmpf ogt, %3, %5 : vector<16x128xf32>
    %7 = vector.broadcast %4 : f32 to vector<16x128xf32>
    %8 = arith.mulf %7, %3 : vector<16x128xf32>
    %9 = arith.select %6, %3, %8 : vector<16x128xi1>, vector<16x128xf32>
    %c0_5 = arith.constant 0 : index
    %c0_6 = arith.constant 0 : index
    %10 = vector.load %arg5[%c0_5, %c0_6] : memref<16x128xf32, #tpu.memory_space<vmem>>, vector<16x128xf32>
    tpu.vector_store %arg5[%c0_5, %c0_6], %9 {strides = array<i32>} : memref<16x128xf32, #tpu.memory_space<vmem>>, vector<16x128xf32>,
    return
  }
  func.func @transform_0(%arg0: i32, %arg1: i32, %arg2: memref<1xf32, #tpu.memory_space<smem>>) -> (i32, i32) {
    %c0_i32 = arith.constant 0 : i32
    %c0_i32_0 = arith.constant 0 : i32
    return %arg0, %c0_i32 : i32, i32
  }
  func.func @transform_1(%arg0: i32, %arg1: i32, %arg2: memref<1xf32, #tpu.memory_space<smem>>) -> (i32, i32) {
    %c0_i32 = arith.constant 0 : i32
    %c0_i32_0 = arith.constant 0 : i32
    return %c0_i32, %arg1 : i32, i32
  }
  func.func @transform_2(%arg0: i32, %arg1: i32, %arg2: memref<1xf32, #tpu.memory_space<smem>>) -> (i32, i32) {
    %c0_i32 = arith.constant 0 : i32
    return %arg0, %arg1 : i32, i32
  }
}

</mosaic_0001>

<llo_original>
// kernel: tpu_custom_call.1
$region0: #{tpu_custom_call.1}
  #allocation0 [shape = 'u32[]', space=smem, size = 0x4, offset = 0x4, fixed_abs, tag = 'smem constant byte address 0x4 - core index']
  #allocation1 [shape = 'u32[144,128]{1,0:T(1,128)}', space=vmem, size = 0x12000, scoped, tag = 'internal scratch']
  #allocation2 [shape = 's32[1]{0}', space=sflag, size = 0x4, scoped, tag = 'scoped memory for tpu_custom_call.1']
  #allocation3 [shape = 'f32[1]{0:T(128)S(6)}', space=smem, size = 0x200, scoped, tag = 'prefetched SMEM operand 0']
  %s0 = inlined_call_operand.<no memory space> [shape: f32[1], index: 0, kind: input, shape index: {}]
  %s1 = inlined_call_operand.hbm [shape: f32[16,32], index: 1, kind: input, shape index: {}]
  %s2 = inlined_call_operand.hbm [shape: bf16[32,128], index: 2, kind: input, shape index: {}]
  %s3 = inlined_call_operand.hbm [shape: f32[16,128], index: 3, kind: output, shape index: {}]
  %s4 = sld [smem:[#allocation0]]
  $region26: #{tpu_custom_call.1} parent=0
    _
  %s6 = ssub.s32 1, %s4
  %s7 = scalar_select 0, %s6, %s4
  %8 = sst [smem:[#allocation3]] %s0
  $region1: #{tpu_custom_call.1} parent=0
    #allocation4 [shape = 'u8[8192]{0}', space=vmem, size = 0x2000, scoped, tag = 'input window, operand 1, single buffered']
    #allocation5 [shape = 's32[1]{0}', space=sflag, size = 0x4, scoped, tag = 'scoped memory for tpu_custom_call.1']
    #allocation6 [shape = 's32[1]{0}', space=sflag, size = 0x4, scoped, tag = 'scoped memory for tpu_custom_call.1']
    #allocation7 [shape = 'u8[8192]{0}', space=vmem, size = 0x2000, scoped, tag = 'input window, operand 2, single buffered']
    #allocation8 [shape = 's32[1]{0}', space=sflag, size = 0x4, scoped, tag = 'scoped memory for tpu_custom_call.1']
    #allocation9 [shape = 'u8[8192]{0}', space=vmem, size = 0x2000, scoped, tag = 'output window, operand 0, single buffered']
    %9 = vsyncpa [#allocation5], 0
    %10 = vsyncpa [#allocation8], 0
    %11 = vsyncpa [#allocation6], 0
    // Predicated region
    $region2: #{tpu_custom_call.1} parent=1 // pred_check
      _
    $region3: #{tpu_custom_call.1} parent=1 // pred_check_branch
      %13 = sbr.rel (0) target = $region5
    $region4: #{tpu_custom_call.1} parent=1 // pred_region
      %s15 = ssub.s32 256, 256
      %16 = vsyncadd [#allocation5], %s15
      %s17 = sshll.u32 [#allocation4], 4
      %s18 = int_to_ptr.vmem [resolvable:$true] %s17
      %23 = dma.hbm_to_vmem [thread:$0]  %s1, 256, %s18, [#allocation5], 128, 128, 8
    $region5: #{tpu_custom_call.1} parent=1 // pred_fallthru
      _
    // Predicated region
    $region6: #{tpu_custom_call.1} parent=1 // pred_check
      _
    $region7: #{tpu_custom_call.1} parent=1 // pred_check_branch
      %25 = sbr.rel (0) target = $region9
    $region8: #{tpu_custom_call.1} parent=1 // pred_region
      %s27 = ssub.s32 256, 256
      %28 = vsyncadd [#allocation8], %s27
      %s29 = sshll.u32 [#allocation7], 4
      %s30 = int_to_ptr.vmem [resolvable:$true] %s29
      %35 = dma.hbm_to_vmem [thread:$0]  %s2, 256, %s30, [#allocation8], 64, 64, 4
    $region9: #{tpu_custom_call.1} parent=1 // pred_fallthru
      _
    // Predicated region
    $region10: #{tpu_custom_call.1} parent=1 // pred_check
      _
    $region11: #{tpu_custom_call.1} parent=1 // pred_check_branch
      %37 = sbr.rel (0) target = $region13
    $region12: #{tpu_custom_call.1} parent=1 // pred_region
      %38 = dma.done [#allocation5], 256
    $region13: #{tpu_custom_call.1} parent=1 // pred_fallthru
      _
    // Predicated region
    $region14: #{tpu_custom_call.1} parent=1 // pred_check
      _
    $region15: #{tpu_custom_call.1} parent=1 // pred_check_branch
      %40 = sbr.rel (0) target = $region17
    $region16: #{tpu_custom_call.1} parent=1 // pred_region
      %41 = dma.done [#allocation8], 256
    $region17: #{tpu_custom_call.1} parent=1 // pred_fallthru
      _
    %v43 = vld [vmem:[#allocation4] sm:$0xff]
    %v44 = vld [vmem:[#allocation4 + $0x8] sm:$0xff]
    %v45 = vpack.c.bf16 %v44, %v43
    %v46 = vld [vmem:[#allocation7] sm:$0xf]
    %v47 = vld [vmem:[#allocation7 + $0x4] sm:$0xf]
    %v48 = vld [vmem:[#allocation7 + $0x8] sm:$0xf]
    %v49 = vld [vmem:[#allocation7 + $0xc] sm:$0xf]
    %v54 = vunpack.c.l.b16 %v46
    %v55 = vunpack.c.l.b16 %v47
    %v56 = vunpack.c.l.b16 %v48
    %v57 = vunpack.c.l.b16 %v49
    %v58 = vpack.c.b16 %v55, %v54
    %v59 = vpack.c.b16 %v57, %v56
    %vm62 = vcmask 261120
    %v64 = vsel %vm62, %v45, 0
    %66 = vmatprep.subr.bf16.mxu0 0
    %67 = vmatpush1.bf16.msra.mxu0 %v58
    %68 = vmatprep.subr.bf16.mxu0 0
    %69 = vmatpush1.bf16.msra.mxu0 %v59
    %70 = vmatprep.subr.bf16.mxu0 0
    %71 = vmatpush1.bf16.msra.mxu0 0
    %72 = vmatprep.subr.bf16.mxu0 0
    %73 = vmatpush1.bf16.msra.mxu0 0
    %74 = vmatprep.subr.bf16.mxu0 0
    %75 = vmatpush1.bf16.msra.mxu0 0
    %76 = vmatprep.subr.bf16.mxu0 0
    %77 = vmatpush1.bf16.msra.mxu0 0
    %78 = vmatprep.subr.bf16.mxu0 0
    %79 = vmatpush1.bf16.msra.mxu0 0
    %80 = vmatprep.subr.bf16.mxu0 0
    %81 = vmatpush1.bf16.msra.mxu0 0
    %82 = vmatprep.subr.bf16.mxu0 0
    %83 = vmatpush1.bf16.msra.mxu0 0
    %84 = vmatprep.subr.bf16.mxu0 0
    %85 = vmatpush1.bf16.msra.mxu0 0
    %86 = vmatprep.subr.bf16.mxu0 0
    %87 = vmatpush1.bf16.msra.mxu0 0
    %88 = vmatprep.subr.bf16.mxu0 0
    %89 = vmatpush1.bf16.msra.mxu0 0
    %90 = vmatprep.subr.bf16.mxu0 0
    %91 = vmatpush1.bf16.msra.mxu0 0
    %92 = vmatprep.subr.bf16.mxu0 0
    %93 = vmatpush1.bf16.msra.mxu0 0
    %94 = vmatprep.subr.bf16.mxu0 0
    %95 = vmatpush1.bf16.msra.mxu0 0
    %96 = vmatprep.subr.bf16.mxu0 0
    %97 = vmatpush1.bf16.msra.mxu0 0
    %98 = vmatprep.mubr.bf16.mxu0 0
    %99 = vmatmul.mubr.bf16.gmra.mrb[0].mxu0 %v64
    %v100 = vpop.f32.mrb[0].mxu0
    %v101 = vadd.f32 0.0, %v100
    %v102 = vpop.f32.mrb[0].mxu0
    %v103 = vpop.f32.mrb[0].mxu0
    %v104 = vadd.f32 0.0, %v103
    %v105 = vpop.f32.mrb[0].mxu0
    %106 = vdwg.mxu0
    %s107 = sld [smem:[#allocation3]]
    %vm108 = vcmp.gt.f32.partialorder %v101, 0.0
    %vm109 = vcmp.gt.f32.partialorder %v104, 0.0
    %v110 = vstv %s107
    %v111 = vmul.f32 %v110, %v101
    %v112 = vmul.f32 %v110, %v104
    %v113 = vsel %vm108, %v101, %v111
    %v114 = vsel %vm109, %v104, %v112
    %115 = vst [vmem:[#allocation9] sm:$0xff] %v113
    %116 = vst [vmem:[#allocation9 + $0x8] sm:$0xff] %v114
    // Predicated region
    $region18: #{tpu_custom_call.1} parent=1 // pred_check
      _
    $region19: #{tpu_custom_call.1} parent=1 // pred_check_branch
      %118 = sbr.rel (0) target = $region21
    $region20: #{tpu_custom_call.1} parent=1 // pred_region
      %s120 = ssub.s32 256, 256
      %121 = vsyncadd [#allocation6], %s120
      %s122 = sshll.u32 [#allocation9], 4
      %s123 = int_to_ptr.vmem [resolvable:$true] %s122
      %128 = dma.vmem_to_hbm [thread:$0]  %s123, 256, %s3, [#allocation6], 128, 128, 8
    $region21: #{tpu_custom_call.1} parent=1 // pred_fallthru
      _
    // Predicated region
    $region22: #{tpu_custom_call.1} parent=1 // pred_check
      _
    $region23: #{tpu_custom_call.1} parent=1 // pred_check_branch
      %130 = sbr.rel (0) target = $region25
    $region24: #{tpu_custom_call.1} parent=1 // pred_region
      %131 = dma.done [#allocation6], 256
    $region25: #{tpu_custom_call.1} parent=1 // pred_fallthru
      _
    %132 = vsyncpa [#allocation5], 1
    %133 = vsyncpa [#allocation8], 1
    %134 = vsyncpa [#allocation6], 1

</llo_original>
